<compile_context>
chip_gen: v7x
topology: tpu7x:2x2x1
jax: 0.10.0
libtpu: 0.0.40
codegen_flags: <defaults>
</compile_context>

<pallas_src>
import functools

import jax
import jax.numpy as jnp
from jax import lax
from jax.experimental import pallas as pl
from jax.experimental.pallas import tpu as pltpu


def _round_up(x, m):
    return (x + m - 1) // m * m


def _cdiv(a, b):
    return -(-a // b)


def _vmem_capacity_bytes():
    try:
        cap = getattr(pltpu.get_tpu_info(), "vmem_capacity_bytes", None)
        if cap:
            return max(int(cap), 32 * 1024 * 1024)
    except Exception:
        pass
    return 64 * 1024 * 1024  # conservative (v7x per-TC VMEM)


def _ln_and_store(x_buf, w_pos_ref, ln_w_ref, ln_b_ref, o_ref, eps):
    """x_buf holds f32 (W_E + W_tt) rows; add W_pos, LayerNorm, store."""
    x = x_buf[...] + w_pos_ref[...].astype(jnp.float32)
    mu = jnp.mean(x, axis=-1, keepdims=True)
    ex2 = jnp.mean(x * x, axis=-1, keepdims=True)          # one-pass statistics
    var = jnp.maximum(ex2 - mu * mu, 0.0)
    inv = lax.rsqrt(var + eps)                              # EUP slot
    y = (x - mu) * inv
    out = y * ln_w_ref[...].astype(jnp.float32) + ln_b_ref[...].astype(jnp.float32)
    o_ref[0] = out.astype(o_ref.dtype)                      # single final cast


def _bert_embed_kernel_vmem(
    tok_ref,      # SMEM scalar prefetch: [batch, pos_p] int32 token ids
    tti_ref,      # SMEM scalar prefetch: [batch, pos_p] int32 token-type ids
    w_e_ref,      # VMEM: (d_vocab, d_model) full, resident token-embedding table
    w_pos_ref,    # VMEM: (block_pos, d_model) positional-embedding tile
    w_tt_ref,     # VMEM: (2, d_model) token-type table
    ln_w_ref,     # VMEM: (1, d_model)
    ln_b_ref,     # VMEM: (1, d_model)
    o_ref,        # VMEM: (1, block_pos, d_model) output tile
    x_buf,        # scratch VMEM (block_pos, d_model) f32
    *,
    eps,
    block_pos,
):
    b = pl.program_id(1)
    start = pl.program_id(0) * block_pos

    # In-VMEM gather: no HBM DMAs at all.  Padded tail rows read row 0 (cheap,
    # valid, and sliced off by the wrapper).
    @pl.loop(0, block_pos)
    def _gather(i):
        p = start + i
        tok = tok_ref[b, p]
        tt = tti_ref[b, p]
        x_buf[pl.ds(i, 1), :] = (
            w_e_ref[pl.ds(tok, 1), :].astype(jnp.float32)
            + w_tt_ref[pl.ds(tt, 1), :].astype(jnp.float32)
        )

    _ln_and_store(x_buf, w_pos_ref, ln_w_ref, ln_b_ref, o_ref, eps)


def _bert_embed_kernel_hbm(
    tok_ref,      # SMEM scalar prefetch: [batch, pos_p] int32 token ids
    tti_ref,      # SMEM scalar prefetch: [batch, pos_p] int32 token-type ids
    w_e_hbm,      # ANY/HBM: (d_vocab, d_model) token-embedding table
    w_pos_ref,    # VMEM: (block_pos, d_model) positional-embedding tile
    w_tt_ref,     # VMEM: (2, d_model) token-type table
    ln_w_ref,     # VMEM: (1, d_model)
    ln_b_ref,     # VMEM: (1, d_model)
    o_ref,        # VMEM: (1, block_pos, d_model) output tile
    we_buf,       # scratch VMEM (2, block_pos, d_model): double-buffered gather
    x_buf,        # scratch VMEM (block_pos, d_model) f32
    sems,         # scratch DMA semaphores (2,)
    *,
    eps,
    block_pos,
    pos,
):
    j = pl.program_id(0)
    b = pl.program_id(1)
    n_b = pl.num_programs(1)
    start = j * block_pos
    slot = b & 1

    def issue_tile(bb, slot_):
        @pl.loop(0, block_pos)
        def _issue(i):
            @pl.when(start + i < pos)          # skip padded tail rows
            def _():
                tok = tok_ref[bb, start + i]
                pltpu.make_async_copy(
                    w_e_hbm.at[pl.ds(tok, 1), :],
                    we_buf.at[slot_, pl.ds(i, 1), :],
                    sems.at[slot_],
                ).start()

    # Prime: the first batch element of this position block gathers its own tile.
    @pl.when(b == 0)
    def _():
        issue_tile(0, 0)

    # Prefetch the *next* batch element's rows into the other slot before
    # waiting, so that gather overlaps this step's wait + compute.  The carry
    # never crosses a j boundary, so megacore splitting of the (parallel)
    # pos-block axis is safe.
    @pl.when(b + 1 < n_b)
    def _():
        issue_tile(b + 1, 1 - slot)

    # Wait for this tile's rows; fold in the token-type row while we are at it.
    @pl.loop(0, block_pos)
    def _consume(i):
        p = start + i
        tt = tti_ref[b, p]                     # scalar read hoisted above the wait

        @pl.when(p < pos)
        def _():
            pltpu.make_async_copy(
                w_e_hbm.at[pl.ds(0, 1), :],    # dummy src: wait only needs sem + size
                we_buf.at[slot, pl.ds(i, 1), :],
                sems.at[slot],
            ).wait()
            x_buf[pl.ds(i, 1), :] = (
                we_buf[slot, pl.ds(i, 1), :].astype(jnp.float32)
                + w_tt_ref[pl.ds(tt, 1), :].astype(jnp.float32)
            )

    _ln_and_store(x_buf, w_pos_ref, ln_w_ref, ln_b_ref, o_ref, eps)


def bert_embed(
    input_ids,
    token_type_ids,
    W_E,
    W_pos,
    W_token_type,
    ln_w,
    ln_b,
    *,
    eps=1e-5,
    block_rows=None,
    force_hbm_gather=False,
):
    """Fused BertEmbed forward. input_ids/token_type_ids: [batch, pos] ints."""
    batch, pos = input_ids.shape
    d_vocab, d_model = W_E.shape
    out_dtype = W_E.dtype  # cfg.dtype

    if token_type_ids is None:
        token_type_ids = jnp.zeros_like(input_ids)

    cap = _vmem_capacity_bytes()
    if block_rows is None:
        block_rows = 512 if cap >= 96 * 1024 * 1024 else 256
    block_rows = max(8, int(block_rows))

    # Pick the block that minimizes tail padding (feedback: avoid wasted rows).
    n_j = max(1, _cdiv(pos, block_rows))
    block_pos = _round_up(_cdiv(pos, n_j), 8)
    pos_p = _round_up(pos, block_pos)
    n_j = pos_p // block_pos
    pad = pos_p - pos

    # Scalar-prefetched id arrays (SMEM).  NOTE: whole [batch, pos_p] arrays;
    # fine for typical BERT shapes (<= ~128 KiB) but very large batch*seq would
    # need per-tile SMEM BlockSpecs instead.
    tok = jnp.pad(input_ids.astype(jnp.int32), ((0, 0), (0, pad)))
    tti = jnp.pad(token_type_ids.astype(jnp.int32), ((0, 0), (0, pad)))
    w_pos_use = jnp.pad(W_pos[:pos], ((0, pad), (0, 0)))       # keep original dtype
    ln_w2d = ln_w.reshape(1, d_model)
    ln_b2d = ln_b.reshape(1, d_model)

    we_bytes = d_vocab * d_model * jnp.dtype(W_E.dtype).itemsize
    tile_f32 = block_pos * d_model * 4
    need_vmem_path = 2 * we_bytes + 12 * tile_f32 + (2 << 20)
    use_vmem_path = (not force_hbm_gather) and (need_vmem_path <= cap - (8 << 20))

    common_specs = [
        pl.BlockSpec((block_pos, d_model), lambda j, b, *_: (j, 0)),  # W_pos (resident across batch)
        pl.BlockSpec((2, d_model), lambda j, b, *_: (0, 0)),          # W_token_type
        pl.BlockSpec((1, d_model), lambda j, b, *_: (0, 0)),          # LN w
        pl.BlockSpec((1, d_model), lambda j, b, *_: (0, 0)),          # LN b
    ]
    out_spec = pl.BlockSpec((1, block_pos, d_model), lambda j, b, *_: (b, j, 0))

    if use_vmem_path:
        kernel = functools.partial(
            _bert_embed_kernel_vmem, eps=float(eps), block_pos=block_pos
        )
        in_specs = [pl.BlockSpec((d_vocab, d_model), lambda j, b, *_: (0, 0))] + common_specs
        scratch = [pltpu.VMEM((block_pos, d_model), jnp.float32)]
        semantics = ("parallel", "parallel")
        vmem_limit = min(cap, max(32 << 20, need_vmem_path + (8 << 20)))
    else:
        kernel = functools.partial(
            _bert_embed_kernel_hbm, eps=float(eps), block_pos=block_pos, pos=pos
        )
        in_specs = [pl.BlockSpec(memory_space=pl.ANY)] + common_specs
        scratch = [
            pltpu.VMEM((2, block_pos, d_model), W_E.dtype),
            pltpu.VMEM((block_pos, d_model), jnp.float32),
            pltpu.SemaphoreType.DMA((2,)),
        ]
        # Cross-step DMA carry requires the batch axis to stay un-split per core.
        semantics = ("parallel", "arbitrary")
        vmem_limit = min(cap, max(32 << 20, 16 * tile_f32 + (10 << 20)))

    rows = batch * pos
    itemsize = jnp.dtype(out_dtype).itemsize
    cost = pl.CostEstimate(
        flops=int(8 * rows * d_model),
        transcendentals=int(rows),
        bytes_accessed=int(
            rows * d_model * itemsize          # gathered W_E rows
            + pos_p * d_model * jnp.dtype(w_pos_use.dtype).itemsize  # W_pos once
            + batch * pos_p * d_model * itemsize                      # output
        ),
    )

    out = pl.pallas_call(
        kernel,
        out_shape=jax.ShapeDtypeStruct((batch, pos_p, d_model), out_dtype),
        grid_spec=pltpu.PrefetchScalarGridSpec(
            num_scalar_prefetch=2,
            grid=(n_j, batch),
            in_specs=in_specs,
            out_specs=out_spec,
            scratch_shapes=scratch,
        ),
        compiler_params=pltpu.CompilerParams(
            dimension_semantics=semantics,
            vmem_limit_bytes=int(vmem_limit),
        ),
        cost_estimate=cost,
    )(tok, tti, W_E, w_pos_use, W_token_type, ln_w2d, ln_b2d)

    return out[:, :pos, :]


def bert_embed_ref(input_ids, token_type_ids, W_E, W_pos, W_tt, w, b, eps=1e-5):
    pos = input_ids.shape[1]
    x = (
        W_E[input_ids].astype(jnp.float32)
        + W_pos[:pos][None, :, :].astype(jnp.float32)
        + W_tt[token_type_ids].astype(jnp.float32)
    )
    mu = x.mean(-1, keepdims=True)
    xc = x - mu
    scale = jnp.sqrt((xc * xc).mean(-1, keepdims=True) + eps)
    y = xc / scale
    return (y * w.astype(jnp.float32) + b.astype(jnp.float32)).astype(W_E.dtype)


def _run_case(key, *, batch, pos, d_vocab, n_ctx, d_model, force_hbm,
              block_rows=None, tol=1e-4):
    k1, k2, k3, k4, k5, k6, k7 = jax.random.split(key, 7)
    W_E = jax.random.normal(k1, (d_vocab, d_model), dtype=jnp.float32)
    W_pos = jax.random.normal(k2, (n_ctx, d_model), dtype=jnp.float32)
    W_tt = jax.random.normal(k3, (2, d_model), dtype=jnp.float32)
    ln_w = 1.0 + 0.1 * jax.random.normal(k4, (d_model,), dtype=jnp.float32)
    ln_b = 0.1 * jax.random.normal(k5, (d_model,), dtype=jnp.float32)
    input_ids = jax.random.randint(k6, (batch, pos), 0, d_vocab, dtype=jnp.int32)
    token_type_ids = jax.random.randint(k7, (batch, pos), 0, 2, dtype=jnp.int32)

    out = bert_embed(
        input_ids, token_type_ids, W_E, W_pos, W_tt, ln_w, ln_b,
        eps=1e-5, block_rows=block_rows, force_hbm_gather=force_hbm,
    )
    out = jax.block_until_ready(out)
    ref = bert_embed_ref(input_ids, token_type_ids, W_E, W_pos, W_tt, ln_w, ln_b, 1e-5)

    assert out.shape == (batch, pos, d_model)
    assert out.dtype == W_E.dtype
    err = float(jnp.max(jnp.abs(out.astype(jnp.float32) - ref.astype(jnp.float32))))
    assert err <= tol, f"mismatch vs reference: {err} (force_hbm={force_hbm})"


if __name__ == "__main__":
    key = jax.random.PRNGKey(0)
    k0, k1, k2, k3 = jax.random.split(key, 4)

    # 1) VMEM-resident W_E path, single tile with a padded tail (pos=7 -> block 8).
    _run_case(k0, batch=2, pos=7, d_vocab=64, n_ctx=16, d_model=128, force_hbm=False)
    # 2) HBM DMA-gather path (forced), same tiny shape.
    _run_case(k1, batch=2, pos=7, d_vocab=64, n_ctx=16, d_model=128, force_hbm=True)
    # 3) HBM path: multiple pos blocks, padded tail, and cross-step gather/compute
    #    overlap across the batch axis (batch > 1).
    _run_case(k2, batch=3, pos=70, d_vocab=97, n_ctx=80, d_model=256,
              force_hbm=True, block_rows=32)
    # 4) Same shape through the VMEM-resident path (multi-block).
    _run_case(k3, batch=3, pos=70, d_vocab=97, n_ctx=80, d_model=256,
              force_hbm=False, block_rows=32)

    print("KERNEL_OK")
</pallas_src>

<mosaic_0001>
module attributes {stable_mosaic.version = 11 : i64} {
  func.func @_bert_embed_kernel_vmem(%arg0: i32, %arg1: i32, %arg2: memref<2x8xi32, #tpu.memory_space<smem>>, %arg3: memref<2x8xi32, #tpu.memory_space<smem>>, %arg4: memref<64x128xf32, #tpu.memory_space<vmem>>, %arg5: memref<8x128xf32, #tpu.memory_space<vmem>>, %arg6: memref<2x128xf32, #tpu.memory_space<vmem>>, %arg7: memref<1x128xf32, #tpu.memory_space<vmem>>, %arg8: memref<1x128xf32, #tpu.memory_space<vmem>>, %arg9: memref<1x8x128xf32, #tpu.memory_space<vmem>>, %arg10: memref<8x128xf32, #tpu.memory_space<vmem>>) attributes {dimension_semantics = [#tpu.dimension_semantics<parallel>, #tpu.dimension_semantics<parallel>], iteration_bounds = array<i64: 1, 2>, scalar_prefetch = 2 : i64, scratch_operands = 1 : i64, tpu.core_type = #tpu.core_type<tc>, window_params = [{pipeline_mode = #tpu.pipeline_mode<synchronous>, transform_indices = @transform_0, window_bounds = array<i64: 64, 128>}, {transform_indices = @transform_1, window_bounds = array<i64: 8, 128>}, {pipeline_mode = #tpu.pipeline_mode<synchronous>, transform_indices = @transform_2, window_bounds = array<i64: 2, 128>}, {pipeline_mode = #tpu.pipeline_mode<synchronous>, transform_indices = @transform_3, window_bounds = array<i64: 1, 128>}, {pipeline_mode = #tpu.pipeline_mode<synchronous>, transform_indices = @transform_4, window_bounds = array<i64: 1, 128>}, {transform_indices = @transform_5, window_bounds = array<i64: 1, 8, 128>}]} {
    %c8_i32 = arith.constant 8 : i32
    %0 = arith.muli %arg0, %c8_i32 : i32
    %c0_i32 = arith.constant 0 : i32
    %c8_i32_0 = arith.constant 8 : i32
    %1 = arith.addi %c0_i32, %c8_i32_0 : i32
    %c1_i32 = arith.constant 1 : i32
    scf.for %arg11 = %c0_i32 to %1 step %c1_i32  : i32 {
      %c1_i32_17 = arith.constant 1 : i32
      %34 = arith.muli %arg11, %c1_i32_17 : i32
      %c0_i32_18 = arith.constant 0 : i32
      %35 = arith.addi %c0_i32_18, %34 : i32
      %36 = arith.addi %0, %35 : i32
      %37 = arith.index_cast %arg1 : i32 to index
      %38 = arith.index_cast %36 : i32 to index
      %39 = memref.load %arg2[%37, %38] : memref<2x8xi32, #tpu.memory_space<smem>>
      %40 = arith.index_cast %arg1 : i32 to index
      %41 = arith.index_cast %36 : i32 to index
      %42 = memref.load %arg3[%40, %41] : memref<2x8xi32, #tpu.memory_space<smem>>
      %43 = arith.index_cast %39 : i32 to index
      %c0_19 = arith.constant 0 : index
      %44 = vector.load %arg4[%43, %c0_19] : memref<64x128xf32, #tpu.memory_space<vmem>>, vector<1x128xf32>
      %45 = arith.index_cast %42 : i32 to index
      %c0_20 = arith.constant 0 : index
      %46 = vector.load %arg6[%45, %c0_20] : memref<2x128xf32, #tpu.memory_space<vmem>>, vector<1x128xf32>
      %47 = arith.addf %44, %46 : vector<1x128xf32>
      %48 = arith.index_cast %35 : i32 to index
      %c0_21 = arith.constant 0 : index
      %49 = vector.load %arg10[%48, %c0_21] : memref<8x128xf32, #tpu.memory_space<vmem>>, vector<1x128xf32>
      tpu.vector_store %arg10[%48, %c0_21], %47 {strides = array<i32>} : memref<8x128xf32, #tpu.memory_space<vmem>>, vector<1x128xf32>,
    }
    %c8_i32_1 = arith.constant 8 : i32
    %c0 = arith.constant 0 : index
    %c0_2 = arith.constant 0 : index
    %2 = vector.load %arg10[%c0, %c0_2] : memref<8x128xf32, #tpu.memory_space<vmem>>, vector<8x128xf32>
    %c0_3 = arith.constant 0 : index
    %c0_4 = arith.constant 0 : index
    %3 = vector.load %arg5[%c0_3, %c0_4] : memref<8x128xf32, #tpu.memory_space<vmem>>, vector<8x128xf32>
    %4 = arith.addf %2, %3 : vector<8x128xf32>
    %cst = arith.constant dense<0.000000e+00> : vector<8xf32>
    %5 = vector.multi_reduction <add>, %4, %cst [1] : vector<8x128xf32> to vector<8xf32>
    %6 = vector.shape_cast %5 : vector<8xf32> to vector<8x1xf32>
    %cst_5 = arith.constant 1.280000e+02 : f32
    %7 = vector.broadcast %cst_5 : f32 to vector<8x1xf32>
    %8 = arith.divf %6, %7 : vector<8x1xf32>
    %9 = arith.mulf %4, %4 : vector<8x128xf32>
    %cst_6 = arith.constant dense<0.000000e+00> : vector<8xf32>
    %10 = vector.multi_reduction <add>, %9, %cst_6 [1] : vector<8x128xf32> to vector<8xf32>
    %11 = vector.shape_cast %10 : vector<8xf32> to vector<8x1xf32>
    %cst_7 = arith.constant 1.280000e+02 : f32
    %12 = vector.broadcast %cst_7 : f32 to vector<8x1xf32>
    %13 = arith.divf %11, %12 : vector<8x1xf32>
    %14 = arith.mulf %8, %8 : vector<8x1xf32>
    %15 = arith.subf %13, %14 : vector<8x1xf32>
    %cst_8 = arith.constant 0.000000e+00 : f32
    %16 = vector.broadcast %cst_8 : f32 to vector<8x1xf32>
    %17 = arith.maximumf %15, %16 : vector<8x1xf32>
    %cst_9 = arith.constant 9.99999974E-6 : f32
    %18 = vector.broadcast %cst_9 : f32 to vector<8x1xf32>
    %19 = arith.addf %17, %18 : vector<8x1xf32>
    %20 = math.rsqrt %19 : vector<8x1xf32>
    %21 = vector.broadcast %8 : vector<8x1xf32> to vector<8x128xf32>
    %22 = arith.subf %4, %21 : vector<8x128xf32>
    %23 = vector.broadcast %20 : vector<8x1xf32> to vector<8x128xf32>
    %24 = arith.mulf %22, %23 : vector<8x128xf32>
    %c0_10 = arith.constant 0 : index
    %c0_11 = arith.constant 0 : index
    %25 = vector.load %arg7[%c0_10, %c0_11] : memref<1x128xf32, #tpu.memory_space<vmem>>, vector<1x128xf32>
    %26 = vector.broadcast %25 : vector<1x128xf32> to vector<8x128xf32>
    %27 = arith.mulf %24, %26 : vector<8x128xf32>
    %c0_12 = arith.constant 0 : index
    %c0_13 = arith.constant 0 : index
    %28 = vector.load %arg8[%c0_12, %c0_13] : memref<1x128xf32, #tpu.memory_space<vmem>>, vector<1x128xf32>
    %29 = vector.broadcast %28 : vector<1x128xf32> to vector<8x128xf32>
    %30 = arith.addf %27, %29 : vector<8x128xf32>
    %c0_14 = arith.constant 0 : index
    %c0_15 = arith.constant 0 : index
    %c0_16 = arith.constant 0 : index
    %31 = vector.load %arg9[%c0_14, %c0_15, %c0_16] : memref<1x8x128xf32, #tpu.memory_space<vmem>>, vector<1x8x128xf32>
    %32 = vector.shape_cast %31 : vector<1x8x128xf32> to vector<8x128xf32>
    %33 = vector.shape_cast %30 : vector<8x128xf32> to vector<1x8x128xf32>
    tpu.vector_store %arg9[%c0_14, %c0_15, %c0_16], %33 {strides = array<i32>} : memref<1x8x128xf32, #tpu.memory_space<vmem>>, vector<1x8x128xf32>,
    return
  }
  func.func @transform_0(%arg0: i32, %arg1: i32, %arg2: memref<2x8xi32, #tpu.memory_space<smem>>, %arg3: memref<2x8xi32, #tpu.memory_space<smem>>) -> (i32, i32) {
    %c0_i32 = arith.constant 0 : i32
    %c0_i32_0 = arith.constant 0 : i32
    %c0_i32_1 = arith.constant 0 : i32
    return %c0_i32, %c0_i32_0 : i32, i32
  }
  func.func @transform_1(%arg0: i32, %arg1: i32, %arg2: memref<2x8xi32, #tpu.memory_space<smem>>, %arg3: memref<2x8xi32, #tpu.memory_space<smem>>) -> (i32, i32) {
    %c0_i32 = arith.constant 0 : i32
    %c0_i32_0 = arith.constant 0 : i32
    return %arg0, %c0_i32 : i32, i32
  }
  func.func @transform_2(%arg0: i32, %arg1: i32, %arg2: memref<2x8xi32, #tpu.memory_space<smem>>, %arg3: memref<2x8xi32, #tpu.memory_space<smem>>) -> (i32, i32) {
    %c0_i32 = arith.constant 0 : i32
    %c0_i32_0 = arith.constant 0 : i32
    %c0_i32_1 = arith.constant 0 : i32
    return %c0_i32, %c0_i32_0 : i32, i32
  }
  func.func @transform_3(%arg0: i32, %arg1: i32, %arg2: memref<2x8xi32, #tpu.memory_space<smem>>, %arg3: memref<2x8xi32, #tpu.memory_space<smem>>) -> (i32, i32) {
    %c0_i32 = arith.constant 0 : i32
    %c0_i32_0 = arith.constant 0 : i32
    %c0_i32_1 = arith.constant 0 : i32
    return %c0_i32, %c0_i32_0 : i32, i32
  }
  func.func @transform_4(%arg0: i32, %arg1: i32, %arg2: memref<2x8xi32, #tpu.memory_space<smem>>, %arg3: memref<2x8xi32, #tpu.memory_space<smem>>) -> (i32, i32) {
    %c0_i32 = arith.constant 0 : i32
    %c0_i32_0 = arith.constant 0 : i32
    %c0_i32_1 = arith.constant 0 : i32
    return %c0_i32, %c0_i32_0 : i32, i32
  }
  func.func @transform_5(%arg0: i32, %arg1: i32, %arg2: memref<2x8xi32, #tpu.memory_space<smem>>, %arg3: memref<2x8xi32, #tpu.memory_space<smem>>) -> (i32, i32, i32) {
    %c0_i32 = arith.constant 0 : i32
    %c0_i32_0 = arith.constant 0 : i32
    return %arg1, %arg0, %c0_i32 : i32, i32, i32
  }
}

</mosaic_0001>

<llo_original>
// kernel: tpu_custom_call.1
$region0: #{tpu_custom_call.1}
  #allocation0 [shape = 'u32[]', space=smem, size = 0x4, offset = 0x4, fixed_abs, tag = 'smem constant byte address 0x4 - core index']
  #allocation1 [shape = 'u32[144,128]{1,0:T(1,128)}', space=vmem, size = 0x12000, scoped, tag = 'internal scratch']
  #allocation2 [shape = 'f32[8,128]{1,0:T(8,128)}', space=vmem, size = 0x1000, scoped, tag = 'scratch operand']
  #allocation3 [shape = 's32[1]{0}', space=sflag, size = 0x4, scoped, tag = 'scoped memory for tpu_custom_call.1']
  #allocation4 [shape = 'u8[1024]{0}', space=smem, size = 0x400, scoped, tag = 'prefetched SMEM operand 0']
  #allocation5 [shape = 'u8[1024]{0}', space=smem, size = 0x400, scoped, tag = 'prefetched SMEM operand 1']
  %s0 = inlined_call_operand.hbm [shape: s32[2,8], index: 0, kind: input, shape index: {}]
  %s1 = inlined_call_operand.vmem [shape: s32[2,8], index: 1, kind: input, shape index: {}]
  %s2 = inlined_call_operand.hbm [shape: f32[64,128], index: 2, kind: input, shape index: {}]
  %s3 = inlined_call_operand.vmem [shape: f32[8,128], index: 3, kind: input, shape index: {}]
  %s4 = inlined_call_operand.vmem [shape: f32[2,128], index: 4, kind: input, shape index: {}]
  %s5 = inlined_call_operand.vmem [shape: f32[1,128], index: 5, kind: input, shape index: {}]
  %s6 = inlined_call_operand.vmem [shape: f32[1,128], index: 6, kind: input, shape index: {}]
  %s7 = inlined_call_operand.hbm [shape: f32[2,8,128], index: 7, kind: output, shape index: {}]
  %s8 = sld [smem:[#allocation0]]
  $region64: #{tpu_custom_call.1} parent=0
    _
  %s10 = ssub.s32 1, %s8
  %s11 = scalar_select 0, %s10, %s8
  %13 = dma.hbm_to_smem %s0, 32, [#allocation4], [#allocation3]
  %s14 = sshll.u32 %s1, 4
  %s15 = int_to_ptr.vmem [resolvable:$true] %s14
  %17 = dma.vmem_to_smem %s15, 32, [#allocation5], [#allocation3]
  %18 = dma.done [#allocation3], 64
  %19 = sfence
  $region1: #{tpu_custom_call.1} parent=0
    #allocation6 [shape = 'u8[32768]{0}', space=vmem, size = 0x8000, scoped, tag = 'input window, operand 2, single buffered']
    #allocation7 [shape = 's32[2]{0}', space=sflag, size = 0x8, scoped, tag = 'scoped memory for tpu_custom_call.1']
    #allocation8 [shape = 's32[2]{0}', space=sflag, size = 0x8, scoped, tag = 'scoped memory for tpu_custom_call.1']
    #allocation9 [shape = 'u8[8192]{0}', space=vmem, size = 0x2000, scoped, tag = 'output window, operand 0']
    %20 = vsyncpa [#allocation7], 0
    %21 = vsyncpa [#allocation8], 0
    %s22 = scalar_lea.sflag [#allocation8], 1
    %23 = vsyncpa %s22, 0
    loop: start=0, step=1, limit=4
    $region2: #{tpu_custom_call.1} parent=1 // loop_pre_header
      _
    $region3: #{tpu_custom_call.1} parent=1 // loop_header
      %s25 = sphi 0, %s29
      %p26 = scmp.ge.s32.totalorder %s25, 4
      %s32 = sphi 0, %s44
      %s33 = sphi 0, %s40
      %s34 = sphi 0, %s32
      %s35 = sphi 0, %s33
      %s36 = sphi 0, %s34
      %s37 = sphi 0, %s35
      %s45 = sphi 0, %s45
      %s47 = sphi 0, %s45
      %s48 = sphi 0, %s47
      %s62 = sphi 0, %s48
      %s68 = sphi 0, %s70
      %s71 = sphi 0, %s68
      %s72 = sphi 0, %s71
      %s88 = sphi 0, %s72
      %s92 = sphi 0, %s92
      %s94 = sphi 0, %s92
      %s95 = sphi 0, %s94
      %s109 = sphi 0, %s95
      %s113 = sphi 0, %s113
      %s115 = sphi 0, %s113
      %s116 = sphi 0, %s115
      %s130 = sphi 0, %s116
      %s134 = sphi 0, %s134
      %s136 = sphi 0, %s134
      %s137 = sphi 0, %s136
      %s151 = sphi 0, %s137
      %s159 = sphi 0, %s161
      %s162 = sphi 0, %s159
      %s163 = sphi 0, %s162
      %s179 = sphi 0, %s163
    $region4: #{tpu_custom_call.1} parent=1 // loop_header_branch
      %28 = sbr.rel (%p26) target = $region8
    $region5: #{tpu_custom_call.1} parent=1 // loop_body
      %s30 = ssub.s32 %s25, 1
      %s31 = ssub.s32 %s25, 2
      %s38 = sadd.s32 1, %s33
      %p39 = scmp.ge.s32.totalorder %s38, 2
      %s40 = scalar_select %p39, 0, %s38
      %s41 = sadd.s32 1, %s32
      %s42 = scalar_select %p39, %s41, %s32
      %p43 = scmp.ge.s32.totalorder %s42, 1
      %s44 = scalar_select %p43, 0, %s42
      %s46 = sadd.s32 %s45, 1
      %p49 = scmp.eq.s32.totalorder %s25, 1
      %p50 = scmp.ne.s32.totalorder %s45, %s47
      %p51 = scmp.eq.s32.totalorder %s25, 0
      %p52 = por %p50, %p51
      %p53 = scmp.ne.s32.totalorder %s45, %s47
      %p54 = scmp.eq.s32.totalorder %s30, 1
      %p55 = por %p53, %p54
      %p56 = scmp.ne.s32.totalorder %s47, %s48
      %p57 = scmp.eq.s32.totalorder %s30, 0
      %p58 = por %p56, %p57
      %p59 = scmp.ne.s32.totalorder %s47, %s48
      %p60 = scmp.eq.s32.totalorder %s31, 1
      %p61 = por %p59, %p60
      %p63 = scmp.ne.s32.totalorder %s48, %s62
      %p64 = scmp.eq.s32.totalorder %s31, 0
      %p65 = por %p63, %p64
      %s66 = ssub.s32 %s32, %s44
      %p67 = scmp.eq.s32.totalorder %s66, 0
      %s69 = sadd.s32 %s68, 1
      %s70 = scalar_select %p67, %s68, %s69
      %p73 = pneg %p67
      %p74 = scmp.eq.s32.totalorder %s25, 1
      %p75 = por %p73, %p74
      %p76 = scmp.ne.s32.totalorder %s68, %s71
      %p77 = scmp.eq.s32.totalorder %s25, 0
      %p78 = por %p76, %p77
      %p79 = scmp.ne.s32.totalorder %s68, %s71
      %p80 = scmp.eq.s32.totalorder %s30, 1
      %p81 = por %p79, %p80
      %p82 = scmp.ne.s32.totalorder %s71, %s72
      %p83 = scmp.eq.s32.totalorder %s30, 0
      %p84 = por %p82, %p83
      %p85 = scmp.ne.s32.totalorder %s71, %s72
      %p86 = scmp.eq.s32.totalorder %s31, 1
      %p87 = por %p85, %p86
      %p89 = scmp.ne.s32.totalorder %s72, %s88
      %p90 = scmp.eq.s32.totalorder %s31, 0
      %p91 = por %p89, %p90
      %s93 = sadd.s32 %s92, 1
      %p96 = scmp.eq.s32.totalorder %s25, 1
      %p97 = scmp.ne.s32.totalorder %s92, %s94
      %p98 = scmp.eq.s32.totalorder %s25, 0
      %p99 = por %p97, %p98
      %p100 = scmp.ne.s32.totalorder %s92, %s94
      %p101 = scmp.eq.s32.totalorder %s30, 1
      %p102 = por %p100, %p101
      %p103 = scmp.ne.s32.totalorder %s94, %s95
      %p104 = scmp.eq.s32.totalorder %s30, 0
      %p105 = por %p103, %p104
      %p106 = scmp.ne.s32.totalorder %s94, %s95
      %p107 = scmp.eq.s32.totalorder %s31, 1
      %p108 = por %p106, %p107
      %p110 = scmp.ne.s32.totalorder %s95, %s109
      %p111 = scmp.eq.s32.totalorder %s31, 0
      %p112 = por %p110, %p111
      %s114 = sadd.s32 %s113, 1
      %p117 = scmp.eq.s32.totalorder %s25, 1
      %p118 = scmp.ne.s32.totalorder %s113, %s115
      %p119 = scmp.eq.s32.totalorder %s25, 0
      %p120 = por %p118, %p119
      %p121 = scmp.ne.s32.totalorder %s113, %s115
      %p122 = scmp.eq.s32.totalorder %s30, 1
      %p123 = por %p121, %p122
      %p124 = scmp.ne.s32.totalorder %s115, %s116
      %p125 = scmp.eq.s32.totalorder %s30, 0
      %p126 = por %p124, %p125
      %p127 = scmp.ne.s32.totalorder %s115, %s116
      %p128 = scmp.eq.s32.totalorder %s31, 1
      %p129 = por %p127, %p128
      %p131 = scmp.ne.s32.totalorder %s116, %s130
      %p132 = scmp.eq.s32.totalorder %s31, 0
      %p133 = por %p131, %p132
      %s135 = sadd.s32 %s134, 1
      %p138 = scmp.eq.s32.totalorder %s25, 1
      %p139 = scmp.ne.s32.totalorder %s134, %s136
      %p140 = scmp.eq.s32.totalorder %s25, 0
      %p141 = por %p139, %p140
      %p142 = scmp.ne.s32.totalorder %s134, %s136
      %p143 = scmp.eq.s32.totalorder %s30, 1
      %p144 = por %p142, %p143
      %p145 = scmp.ne.s32.totalorder %s136, %s137
      %p146 = scmp.eq.s32.totalorder %s30, 0
      %p147 = por %p145, %p146
      %p148 = scmp.ne.s32.totalorder %s136, %s137
      %p149 = scmp.eq.s32.totalorder %s31, 1
      %p150 = por %p148, %p149
      %p152 = scmp.ne.s32.totalorder %s137, %s151
      %p153 = scmp.eq.s32.totalorder %s31, 0
      %p154 = por %p152, %p153
      %s155 = ssub.s32 %s33, %s40
      %s156 = ssub.s32 %s32, %s44
      %s157 = sor.u32 %s155, %s156
      %p158 = scmp.eq.s32.totalorder %s157, 0
      %s160 = sadd.s32 %s159, 1
      %s161 = scalar_select %p158, %s159, %s160
      %p164 = pneg %p158
      %p165 = scmp.eq.s32.totalorder %s25, 1
      %p166 = por %p164, %p165
      %p167 = scmp.ne.s32.totalorder %s159, %s162
      %p168 = scmp.eq.s32.totalorder %s25, 0
      %p169 = por %p167, %p168
      %p170 = scmp.ne.s32.totalorder %s159, %s162
      %p171 = scmp.eq.s32.totalorder %s30, 1
      %p172 = por %p170, %p171
      %p173 = scmp.ne.s32.totalorder %s162, %s163
      %p174 = scmp.eq.s32.totalorder %s30, 0
      %p175 = por %p173, %p174
      %p176 = scmp.ne.s32.totalorder %s162, %s163
      %p177 = scmp.eq.s32.totalorder %s31, 1
      %p178 = por %p176, %p177
      %p180 = scmp.ne.s32.totalorder %s163, %s179
      %p181 = scmp.eq.s32.totalorder %s31, 0
      %p182 = por %p180, %p181
      %p183 = scmp.le.s32.totalorder 1, %s25
      %p184 = scmp.lt.s32.totalorder %s25, 3
      %p185 = pnand %p183, %p184
      %p186 = pneg %p185
      // Predicated region
      $region9: #{tpu_custom_call.1} parent=5 // pred_check
        _
      $region10: #{tpu_custom_call.1} parent=5 // pred_check_branch
        %188 = sbr.rel (%p185) target = $region12
      $region11: #{tpu_custom_call.1} parent=5 // pred_region
        %s189 = ssub.s32 %s25, 1
        // Predicated region
        $region13: #{tpu_custom_call.1} parent=11 // pred_check
          %p190 = pneg %p58
        $region14: #{tpu_custom_call.1} parent=11 // pred_check_branch
          %192 = sbr.rel (%p190) target = $region16
        $region15: #{tpu_custom_call.1} parent=11 // pred_region
          %s194 = ssub.s32 1024, 1024
          %195 = vsyncadd [#allocation7], %s194
          %s196 = sshll.u32 [#allocation6], 4
          %s197 = int_to_ptr.vmem [resolvable:$true] %s196
          %202 = dma.hbm_to_vmem [thread:$0]  %s2, 1024, %s197, [#allocation7], 128, 128, 8
        $region16: #{tpu_custom_call.1} parent=11 // pred_fallthru
          _
        // Predicated region
        $region17: #{tpu_custom_call.1} parent=11 // pred_check
          %p203 = pneg %p84
        $region18: #{tpu_custom_call.1} parent=11 // pred_check_branch
          %205 = sbr.rel (%p203) target = $region20
        $region19: #{tpu_custom_call.1} parent=11 // pred_region
          %p206 = scmp.lt.s32.totalorder %s34, 0
          %s207 = scalar_select %p206, %s34, 0
          %s208 = smul.addr %s207, 8
          %s209 = scalar_lea.vmem %s3, %s208
        $region20: #{tpu_custom_call.1} parent=11 // pred_fallthru
          _
        // Predicated region
        $region21: #{tpu_custom_call.1} parent=11 // pred_check
          %p210 = pneg %p105
        $region22: #{tpu_custom_call.1} parent=11 // pred_check_branch
          %212 = sbr.rel (%p210) target = $region24
        $region23: #{tpu_custom_call.1} parent=11 // pred_region
          _
        $region24: #{tpu_custom_call.1} parent=11 // pred_fallthru
          _
        // Predicated region
        $region25: #{tpu_custom_call.1} parent=11 // pred_check
          %p213 = pneg %p126
        $region26: #{tpu_custom_call.1} parent=11 // pred_check_branch
          %215 = sbr.rel (%p213) target = $region28
        $region27: #{tpu_custom_call.1} parent=11 // pred_region
          _
        $region28: #{tpu_custom_call.1} parent=11 // pred_fallthru
          _
        // Predicated region
        $region29: #{tpu_custom_call.1} parent=11 // pred_check
          %p216 = pneg %p147
        $region30: #{tpu_custom_call.1} parent=11 // pred_check_branch
          %218 = sbr.rel (%p216) target = $region32
        $region31: #{tpu_custom_call.1} parent=11 // pred_region
          _
        $region32: #{tpu_custom_call.1} parent=11 // pred_fallthru
          _
      $region12: #{tpu_custom_call.1} parent=5 // pred_fallthru
        _
      %p219 = scmp.lt.s32.totalorder %s25, 2
      // Predicated region
      $region33: #{tpu_custom_call.1} parent=5 // pred_check
        %p220 = pneg %p219
      $region34: #{tpu_custom_call.1} parent=5 // pred_check_branch
        %222 = sbr.rel (%p220) target = $region36
      $region35: #{tpu_custom_call.1} parent=5 // pred_region
        _
      $region36: #{tpu_custom_call.1} parent=5 // pred_fallthru
        _
      %p223 = scmp.le.s32.totalorder 1, %s25
      %p224 = scmp.lt.s32.totalorder %s25, 3
      %p225 = pnand %p223, %p224
      %p226 = pneg %p225
      // Predicated region
      $region37: #{tpu_custom_call.1} parent=5 // pred_check
        _
      $region38: #{tpu_custom_call.1} parent=5 // pred_check_branch
        %228 = sbr.rel (%p225) target = $region40
      $region39: #{tpu_custom_call.1} parent=5 // pred_region
        %s229 = ssub.s32 %s25, 1
        // Predicated region
        $region41: #{tpu_custom_call.1} parent=39 // pred_check
          %p230 = pneg %p58
        $region42: #{tpu_custom_call.1} parent=39 // pred_check_branch
          %232 = sbr.rel (%p230) target = $region44
        $region43: #{tpu_custom_call.1} parent=39 // pred_region
          %233 = dma.done [#allocation7], 1024
        $region44: #{tpu_custom_call.1} parent=39 // pred_fallthru
          _
        %p234 = pneg %p58
        %p235 = pneg %p55
        %p236 = scmp.lt.s32.totalorder %s34, 0
        %s237 = scalar_select %p236, %s34, 0
        %s238 = smul.addr %s237, 8
        %s239 = scalar_lea.vmem %s3, %s238
        %p240 = pneg %p84
        %p241 = pneg %p81
        %p242 = pneg %p105
        %p243 = pneg %p102
        %p244 = pneg %p126
        %p245 = pneg %p123
        %p246 = pneg %p147
        %p247 = pneg %p144
        %p248 = pneg %p175
        %p249 = pneg %p172
        %s250 = sand.u32 %s162, 1
        %s251 = scalar_lea.sflag [#allocation8], %s250
        %s252 = sand.u32 %s162, 1
        %s253 = smul.addr %s252, 8
        %s254 = scalar_lea.vmem [#allocation9], %s253
        %p255 = scmp.lt.s32.totalorder %s34, 0
        %s256 = scalar_select %p255, %s34, 0
        %s257 = smul.addr %s256, 8
        %s258 = scalar_lea.vmem %s3, %s257
        %s259 = smul.u32 %s34, 8
        loop: start=0, step=1, limit=8
        $region45: #{tpu_custom_call.1} parent=39 // loop_pre_header
          _
        $region46: #{tpu_custom_call.1} parent=39 // loop_header
          %s261 = sphi 0, %s265
          %p262 = scmp.ge.s32.totalorder %s261, 8
        $region47: #{tpu_custom_call.1} parent=39 // loop_header_branch
          %264 = sbr.rel (%p262) target = $region51
        $region48: #{tpu_custom_call.1} parent=39 // loop_body
          %s266 = sadd.s32 %s259, %s261
          %s267 = sshra.s32 %s266, 7
          %s268 = sand.u32 %s266, 127
          %s269 = sadd.s32 %s267, %s35
          %s270 = smul.u32 %s269, 128
          %s271 = sshra.s32 %s266, 7
          %s272 = sand.u32 %s266, 127
          %s273 = sadd.s32 %s270, %s272
          %s274 = sld [smem:[#allocation4 + %s273]]
          %s275 = sld [smem:[#allocation5 + %s273]]
          %s276 = scalar_lea.vmem [#allocation6], %s274
          %v277 = vld [vmem:[%s276] sm:$0x1]
          %s278 = scalar_lea.vmem %s4, %s275
          %v279 = vld [vmem:[%s278] sm:$0x1]
          %v280 = vadd.f32 %v277, %v279
          %s281 = scalar_lea.vmem [#allocation2], %s261
          %282 = vst [vmem:[%s281] sm:$0x1] %v280
        $region49: #{tpu_custom_call.1} parent=39 // loop_footer
          %s265 = sadd.s32 1, %s261
        $region50: #{tpu_custom_call.1} parent=39 // loop_footer_branch
          %260 = sbr.rel target = $region46
        $region51: #{tpu_custom_call.1} parent=39 // loop_exit
          _
        %v283 = vld [vmem:[#allocation2] sm:$0xff]
        %v284 = vld [vmem:[%s258] sm:$0xff]
        %v285 = vadd.f32 %v283, %v284
        %286 = vadd.xlane.f32.xlu0 %v285
        %v287 = vpop.xlane.xlu0 %286
        %v288 = vrcp.pop 128.0
        %v289 = vmul.f32 %v287, %v288
        %v290 = vmul.f32 %v285, %v285
        %291 = vadd.xlane.f32.xlu0 %v290
        %v292 = vpop.xlane.xlu0 %291
        %v293 = vmul.f32 %v292, %v288
        %v294 = vmul.f32 %v289, %v289
        %v295 = vsub.f32 %v293, %v294
        %v296 = vmax.f32 %v295, 0.0
        %v297 = vadd.f32 %v296, 1e-05
        %v298 = vrsqrt.pop %v297
        %v299 = vsub.f32 %v285, %v289
        %v300 = vmul.f32 %v299, %v298
        %v301 = vld [vmem:[%s5] sm:$0x1]
        %v303 = vlaneseq
        %v304 = vshrl.u32 %v303, 7
        %v305 = vsub.s32 0, %v304
        %v306 = vrot.slane %v301, %v305
        %v308 = vmul.f32 %v300, %v306
        %v309 = vld [vmem:[%s6] sm:$0x1]
        %v311 = vlaneseq
        %v312 = vshrl.u32 %v311, 7
        %v313 = vsub.s32 0, %v312
        %v314 = vrot.slane %v309, %v313
        %v316 = vadd.f32 %v308, %v314
        %317 = vst [vmem:[%s254] sm:$0xff] %v316
        %s318 = sand.u32 %s162, 1
        %s319 = scalar_lea.sflag [#allocation8], %s318
        %s320 = sand.u32 %s162, 1
        %s321 = smul.addr %s320, 8
        %s322 = scalar_lea.vmem [#allocation9], %s321
        // Predicated region
        $region52: #{tpu_custom_call.1} parent=39 // pred_check
          %p323 = pneg %p172
        $region53: #{tpu_custom_call.1} parent=39 // pred_check_branch
          %325 = sbr.rel (%p323) target = $region55
        $region54: #{tpu_custom_call.1} parent=39 // pred_region
          %s327 = ssub.s32 128, 128
          %328 = vsyncadd %s319, %s327
          %s329 = sadd.s32 %s34, %s35
          %s330 = smul.addr %s329, 128
          %s331 = scalar_lea.hbm %s7, %s330
          %s333 = sshll.u32 %s322, 4
          %s334 = int_to_ptr.vmem [resolvable:$true] %s333
          %336 = dma.vmem_to_hbm [thread:$0]  %s334, 128, %s331, %s319
        $region55: #{tpu_custom_call.1} parent=39 // pred_fallthru
          _
      $region40: #{tpu_custom_call.1} parent=5 // pred_fallthru
        _
      %p337 = scmp.le.s32.totalorder 2, %s25
      // Predicated region
      $region56: #{tpu_custom_call.1} parent=5 // pred_check
        %p338 = pneg %p337
      $region57: #{tpu_custom_call.1} parent=5 // pred_check_branch
        %340 = sbr.rel (%p338) target = $region59
      $region58: #{tpu_custom_call.1} parent=5 // pred_region
        %s341 = ssub.s32 %s25, 2
        // Predicated region
        $region60: #{tpu_custom_call.1} parent=58 // pred_check
          %p342 = pneg %p178
        $region61: #{tpu_custom_call.1} parent=58 // pred_check_branch
          %344 = sbr.rel (%p342) target = $region63
        $region62: #{tpu_custom_call.1} parent=58 // pred_region
          %s345 = sand.u32 %s163, 1
          %s346 = scalar_lea.sflag [#allocation8], %s345
          %s347 = sand.u32 %s163, 1
          %s348 = smul.addr %s347, 8
          %s349 = scalar_lea.vmem [#allocation9], %s348
          %350 = dma.done %s346, 128
        $region63: #{tpu_custom_call.1} parent=58 // pred_fallthru
          _
      $region59: #{tpu_custom_call.1} parent=5 // pred_fallthru
        _
    $region6: #{tpu_custom_call.1} parent=1 // loop_footer
      %s29 = sadd.s32 1, %s25
    $region7: #{tpu_custom_call.1} parent=1 // loop_footer_branch
      %24 = sbr.rel target = $region3
    $region8: #{tpu_custom_call.1} parent=1 // loop_exit
      _
    %351 = vsyncpa [#allocation7], 1
    %s352 = scalar_lea.sflag [#allocation7], 1
    %353 = vsyncpa %s352, 1
    %354 = vsyncpa [#allocation8], 1
    %s355 = scalar_lea.sflag [#allocation8], 1
    %356 = vsyncpa %s355, 1

</llo_original>
